<compile_context>
chip_gen: v6e
topology: v6e:2x2x1
jax: 0.10.0
libtpu: 0.0.40
codegen_flags: <defaults>
</compile_context>

<pallas_src>
import jax
import jax.numpy as jnp
from jax.experimental import pallas as pl
from jax.experimental.pallas import tpu as pltpu

C_IN = 64
C_OUT = 64
C_PAD = 128                       # lane-dense accumulator/output width
TM = 256                          # row tile (parallel axis)
TK_CANDIDATES = (2048, 1024, 512) # reduction tile (largest that divides n_pad)


def gcn_agg_kernel(a_ref, xw_ref, o_ref):
    """One (TM, C_PAD) output tile: accumulate A[i-tile, k-slab] @ XW[k-slab].

    a_ref:  (TM, TK)      int8  raw adjacency counts (with self loops)
    xw_ref: (n_pad, 128)  bf16  VMEM-resident, column-normalized X @ W^T
    o_ref:  (TM, 128)     f32   output block, doubles as the accumulator
                                (out index_map is constant in k)
    """
    k = pl.program_id(1)
    tk = a_ref.shape[1]

    @pl.when(k == 0)
    def _():
        o_ref[...] = jnp.zeros_like(o_ref)

    # int8 adjacency stream upcast to bf16 right before the MXU (VPU convert,
    # hidden under the adjacency DMA).  bf16 x bf16 runs the MXU at native
    # rate on all generations; accumulate in f32.
    a_bf16 = a_ref[...].astype(jnp.bfloat16)
    start = pl.multiple_of(k * tk, tk)
    xw_slab = xw_ref[pl.ds(start, tk), :]
    o_ref[...] += jnp.dot(a_bf16, xw_slab, preferred_element_type=jnp.float32)


def _round_up(n, m):
    return ((n + m - 1) // m) * m


def gcn_forward(x, edge_index, weight, bias):
    """GCNConv(64, 64) forward.

    x:          [N, 64] float32 node features
    edge_index: [2, E]  int32, row 0 = source nodes, row 1 = target nodes
    weight:     [C_out, C_in] (torch Linear layout)
    bias:       [C_out]
    """
    N = x.shape[0]
    # Pad to a multiple of 512 (never falls back to 128-tiles; >=2 row tiles
    # of TM=256 even for tiny graphs so both v7x TensorCores get work).
    n_pad = _round_up(max(N, 2 * TM), 512)
    tk = next(t for t in TK_CANDIDATES if n_pad % t == 0)

    # --- glue (XLA): int8 adjacency with self-loops + O(E) degree ---
    idx = edge_index.astype(jnp.int32)
    loops = jnp.arange(N, dtype=jnp.int32)
    src = jnp.concatenate([idx[0], loops])
    dst = jnp.concatenate([idx[1], loops])

    # A[i, j] = #edges j -> i (source_to_target flow).  Built directly in int8
    # (edge multiplicities < 128 are exact) — no f32 N^2 intermediate.
    adj = jnp.zeros((n_pad, n_pad), jnp.int8).at[dst, src].add(jnp.int8(1))
    # In-degree incl. self-loop via O(E) scatter (matches gcn_norm).
    deg = jnp.zeros((n_pad,), jnp.float32).at[dst].add(1.0)
    dinv = jnp.where(deg > 0, jax.lax.rsqrt(deg), 0.0)

    # --- hoisted, column-side-normalized X @ W^T (tiny: O(N*64*64)) ---
    # W is zero-padded to 128 output columns for lane-dense stores; extra
    # columns stay exactly zero and are sliced off below.
    w_pad = jnp.zeros((C_PAD, C_IN), jnp.float32).at[:C_OUT, :].set(
        weight.astype(jnp.float32))
    x_pad = jnp.zeros((n_pad, C_IN), jnp.float32).at[:N, :].set(
        x.astype(jnp.float32))
    xw_scaled = (dinv[:, None] * (x_pad @ w_pad.T)).astype(jnp.bfloat16)

    grid = (n_pad // TM, n_pad // tk)  # (parallel row tiles, reduction tiles)

    out_pad = pl.pallas_call(
        gcn_agg_kernel,
        out_shape=jax.ShapeDtypeStruct((n_pad, C_PAD), jnp.float32),
        grid_spec=pltpu.PrefetchScalarGridSpec(
            num_scalar_prefetch=0,
            grid=grid,
            in_specs=[
                # Dominant int8 adjacency stream (if DMA is still exposed on
                # v7x after these fixes, bump to pipeline_mode=pl.Buffered(3)).
                pl.BlockSpec((TM, tk), lambda i, k: (i, k)),
                # XW: full-extent, constant index_map -> fetched once, stays
                # resident in VMEM for the whole grid.
                pl.BlockSpec((n_pad, C_PAD), lambda i, k: (0, 0)),
            ],
            out_specs=pl.BlockSpec((TM, C_PAD), lambda i, k: (i, 0)),
        ),
        compiler_params=pltpu.CompilerParams(
            dimension_semantics=("parallel", "arbitrary"),
        ),
    )(adj, xw_scaled)

    # Row-side normalization + bias, fused with the output slice in XLA.
    return dinv[:N, None] * out_pad[:N, :C_OUT] + bias.astype(jnp.float32)


def reference_gcn(x, edge_index, weight, bias):
    """Pure-JAX f32 reference of the same math (unpadded, dense)."""
    N = x.shape[0]
    loops = jnp.arange(N, dtype=edge_index.dtype)
    src = jnp.concatenate([edge_index[0], loops])
    dst = jnp.concatenate([edge_index[1], loops])
    adj = jnp.zeros((N, N), jnp.float32).at[dst, src].add(1.0)
    deg = adj.sum(axis=1)
    dinv = jnp.where(deg > 0, jax.lax.rsqrt(deg), 0.0)
    a_hat = dinv[:, None] * adj * dinv[None, :]
    return a_hat @ (x.astype(jnp.float32) @ weight.T) + bias


def _run_case(key, n_nodes, n_edges, weight, bias):
    k_x, k_src, k_dst = jax.random.split(key, 3)
    x = jax.random.normal(k_x, (n_nodes, C_IN), dtype=jnp.float32)
    edge_index = jnp.stack(
        [
            jax.random.randint(k_src, (n_edges,), 0, n_nodes, dtype=jnp.int32),
            jax.random.randint(k_dst, (n_edges,), 0, n_nodes, dtype=jnp.int32),
        ]
    )
    out = gcn_forward(x, edge_index, weight, bias)
    jax.block_until_ready(out)
    ref = reference_gcn(x, edge_index, weight, bias)
    assert out.shape == ref.shape
    # bf16 rhs on the MXU gives ~0.4% relative error vs the f32 reference.
    assert jnp.allclose(out, ref, atol=2e-2, rtol=2e-2), (
        f"mismatch vs JAX reference at N={n_nodes}: "
        f"max abs err {float(jnp.max(jnp.abs(out - ref)))}"
    )


if __name__ == "__main__":
    key = jax.random.PRNGKey(0)
    k_w, k_b, k_case1, k_case2 = jax.random.split(key, 4)

    # Deterministic parameter init (Glorot-uniform weight, as in GCNConv).
    limit = (6.0 / (C_IN + C_OUT)) ** 0.5
    weight = jax.random.uniform(
        k_w, (C_OUT, C_IN), minval=-limit, maxval=limit, dtype=jnp.float32
    )
    bias = 0.1 * jax.random.normal(k_b, (C_OUT,), dtype=jnp.float32)

    # Tiny graph: pads to 512 -> grid (2, 1).
    _run_case(k_case1, n_nodes=16, n_edges=32, weight=weight, bias=bias)
    # Larger graph: pads to 1536 -> grid (6, 3), exercises the k reduction loop.
    _run_case(k_case2, n_nodes=1200, n_edges=4000, weight=weight, bias=bias)

    print("KERNEL_OK")
</pallas_src>

<mosaic_0001>
module attributes {stable_mosaic.version = 11 : i64} {
  func.func @gcn_agg_kernel(%arg0: i32, %arg1: i32, %arg2: memref<256x512xi8, #tpu.memory_space<vmem>>, %arg3: memref<512x128xbf16, #tpu.memory_space<vmem>>, %arg4: memref<256x128xf32, #tpu.memory_space<vmem>>) attributes {dimension_semantics = [#tpu.dimension_semantics<parallel>, #tpu.dimension_semantics<arbitrary>], iteration_bounds = array<i64: 2, 1>, scalar_prefetch = 0 : i64, scratch_operands = 0 : i64, tpu.core_type = #tpu.core_type<tc>, window_params = [{transform_indices = @transform_0, window_bounds = array<i64: 256, 512>}, {pipeline_mode = #tpu.pipeline_mode<synchronous>, transform_indices = @transform_1, window_bounds = array<i64: 512, 128>}, {transform_indices = @transform_2, window_bounds = array<i64: 256, 128>}]} {
    %c0_i32 = arith.constant 0 : i32
    %0 = arith.cmpi eq, %arg1, %c0_i32 : i32
    %1 = arith.extui %0 : i1 to i32
    %c0_i32_0 = arith.constant 0 : i32
    %2 = arith.cmpi ne, %1, %c0_i32_0 : i32
    scf.if %2 {
      %cst_7 = arith.constant 0.000000e+00 : f32
      %13 = vector.broadcast %cst_7 : f32 to vector<256x128xf32>
      %c0_8 = arith.constant 0 : index
      %c0_9 = arith.constant 0 : index
      %14 = vector.load %arg4[%c0_8, %c0_9] : memref<256x128xf32, #tpu.memory_space<vmem>>, vector<256x128xf32>
      tpu.vector_store %arg4[%c0_8, %c0_9], %13 {strides = array<i32>} : memref<256x128xf32, #tpu.memory_space<vmem>>, vector<256x128xf32>,
    } else {
    }
    %c0 = arith.constant 0 : index
    %c0_1 = arith.constant 0 : index
    %3 = vector.load %arg2[%c0, %c0_1] : memref<256x512xi8, #tpu.memory_space<vmem>>, vector<256x512xi8>
    %4 = arith.sitofp %3 : vector<256x512xi8> to vector<256x512xbf16>
    %c512_i32 = arith.constant 512 : i32
    %5 = arith.muli %arg1, %c512_i32 : i32
    %6 = tpu.assume_multiple %5, 512 : i32
    %7 = arith.index_cast %6 : i32 to index
    %c0_2 = arith.constant 0 : index
    %8 = vector.load %arg3[%7, %c0_2] : memref<512x128xbf16, #tpu.memory_space<vmem>>, vector<512x128xbf16>
    %c0_3 = arith.constant 0 : index
    %c0_4 = arith.constant 0 : index
    %9 = vector.load %arg4[%c0_3, %c0_4] : memref<256x128xf32, #tpu.memory_space<vmem>>, vector<256x128xf32>
    %cst = arith.constant dense<0.000000e+00> : vector<256x128xf32>
    %10 = tpu.matmul %4, %8, %cst {dimension_numbers = #tpu.dot_dimension_numbers<[1], [0], [0], [1], [0, 0, 1, 1], [], []>} : vector<256x512xbf16>, vector<512x128xbf16>, vector<256x128xf32> -> vector<256x128xf32>
    %11 = arith.addf %9, %10 : vector<256x128xf32>
    %c0_5 = arith.constant 0 : index
    %c0_6 = arith.constant 0 : index
    %12 = vector.load %arg4[%c0_5, %c0_6] : memref<256x128xf32, #tpu.memory_space<vmem>>, vector<256x128xf32>
    tpu.vector_store %arg4[%c0_5, %c0_6], %11 {strides = array<i32>} : memref<256x128xf32, #tpu.memory_space<vmem>>, vector<256x128xf32>,
    return
  }
  func.func @transform_0(%arg0: i32, %arg1: i32) -> (i32, i32) {
    %c0_i32 = arith.constant 0 : i32
    return %arg0, %arg1 : i32, i32
  }
  func.func @transform_1(%arg0: i32, %arg1: i32) -> (i32, i32) {
    %c0_i32 = arith.constant 0 : i32
    %c0_i32_0 = arith.constant 0 : i32
    %c0_i32_1 = arith.constant 0 : i32
    return %c0_i32, %c0_i32_0 : i32, i32
  }
  func.func @transform_2(%arg0: i32, %arg1: i32) -> (i32, i32) {
    %c0_i32 = arith.constant 0 : i32
    %c0_i32_0 = arith.constant 0 : i32
    return %arg0, %c0_i32 : i32, i32
  }
}

</mosaic_0001>

<llo_original>
// kernel: tpu_custom_call.1
$region0: #{tpu_custom_call.1}
  #allocation0 [shape = 'u32[]', space=smem, size = 0x4, offset = 0x4, fixed_abs, tag = 'smem constant byte address 0x4 - core index']
  #allocation1 [shape = 'u32[144,128]{1,0:T(1,128)}', space=vmem, size = 0x12000, scoped, tag = 'internal scratch']
  %s0 = inlined_call_operand.hbm [shape: s8[512,512], index: 0, kind: input, shape index: {}]
  %s1 = inlined_call_operand.hbm [shape: bf16[512,128], index: 1, kind: input, shape index: {}]
  %s2 = inlined_call_operand.hbm [shape: f32[512,128], index: 2, kind: output, shape index: {}]
  %s3 = sld [smem:[#allocation0]]
  $region53: #{tpu_custom_call.1} parent=0
    _
  %s5 = ssub.s32 1, %s3
  %s6 = scalar_select 0, %s5, %s3
  $region1: #{tpu_custom_call.1} parent=0
    #allocation2 [shape = 'u8[262144]{0}', space=vmem, size = 0x40000, scoped, tag = 'input window, operand 0']
    #allocation3 [shape = 's32[2]{0}', space=sflag, size = 0x8, scoped, tag = 'scoped memory for tpu_custom_call.1']
    #allocation4 [shape = 's32[2]{0}', space=sflag, size = 0x8, scoped, tag = 'scoped memory for tpu_custom_call.1']
    #allocation5 [shape = 'u8[131072]{0}', space=vmem, size = 0x20000, scoped, tag = 'input window, operand 1, single buffered']
    #allocation6 [shape = 's32[1]{0}', space=sflag, size = 0x4, scoped, tag = 'scoped memory for tpu_custom_call.1']
    #allocation7 [shape = 'u8[262144]{0}', space=vmem, size = 0x40000, scoped, tag = 'output window, operand 0']
    %7 = vsyncpa [#allocation3], 0
    %s8 = scalar_lea.sflag [#allocation3], 1
    %9 = vsyncpa %s8, 0
    %10 = vsyncpa [#allocation6], 0
    %11 = vsyncpa [#allocation4], 0
    %s12 = scalar_lea.sflag [#allocation4], 1
    %13 = vsyncpa %s12, 0
    loop: start=0, step=1, limit=4
    $region2: #{tpu_custom_call.1} parent=1 // loop_pre_header
      _
    $region3: #{tpu_custom_call.1} parent=1 // loop_header
      %s15 = sphi 0, %s19
      %p16 = scmp.ge.s32.totalorder %s15, 4
      %s22 = sphi 0, %s34
      %s23 = sphi 0, %s30
      %s24 = sphi 0, %s22
      %s25 = sphi 0, %s23
      %s26 = sphi 0, %s24
      %s27 = sphi 0, %s25
      %s39 = sphi 0, %s41
      %s42 = sphi 0, %s39
      %s43 = sphi 0, %s42
      %s59 = sphi 0, %s43
      %s63 = sphi 0, %s63
      %s65 = sphi 0, %s63
      %s66 = sphi 0, %s65
      %s80 = sphi 0, %s66
      %s86 = sphi 0, %s88
      %s89 = sphi 0, %s86
      %s90 = sphi 0, %s89
      %s106 = sphi 0, %s90
    $region4: #{tpu_custom_call.1} parent=1 // loop_header_branch
      %18 = sbr.rel (%p16) target = $region8
    $region5: #{tpu_custom_call.1} parent=1 // loop_body
      %s20 = ssub.s32 %s15, 1
      %s21 = ssub.s32 %s15, 2
      %s28 = sadd.s32 1, %s23
      %p29 = scmp.ge.s32.totalorder %s28, 1
      %s30 = scalar_select %p29, 0, %s28
      %s31 = sadd.s32 1, %s22
      %s32 = scalar_select %p29, %s31, %s22
      %p33 = scmp.ge.s32.totalorder %s32, 2
      %s34 = scalar_select %p33, 0, %s32
      %s35 = ssub.s32 %s22, %s34
      %s36 = ssub.s32 %s23, %s30
      %s37 = sor.u32 %s35, %s36
      %p38 = scmp.eq.s32.totalorder %s37, 0
      %s40 = sadd.s32 %s39, 1
      %s41 = scalar_select %p38, %s39, %s40
      %p44 = pneg %p38
      %p45 = scmp.eq.s32.totalorder %s15, 1
      %p46 = por %p44, %p45
      %p47 = scmp.ne.s32.totalorder %s39, %s42
      %p48 = scmp.eq.s32.totalorder %s15, 0
      %p49 = por %p47, %p48
      %p50 = scmp.ne.s32.totalorder %s39, %s42
      %p51 = scmp.eq.s32.totalorder %s20, 1
      %p52 = por %p50, %p51
      %p53 = scmp.ne.s32.totalorder %s42, %s43
      %p54 = scmp.eq.s32.totalorder %s20, 0
      %p55 = por %p53, %p54
      %p56 = scmp.ne.s32.totalorder %s42, %s43
      %p57 = scmp.eq.s32.totalorder %s21, 1
      %p58 = por %p56, %p57
      %p60 = scmp.ne.s32.totalorder %s43, %s59
      %p61 = scmp.eq.s32.totalorder %s21, 0
      %p62 = por %p60, %p61
      %s64 = sadd.s32 %s63, 1
      %p67 = scmp.eq.s32.totalorder %s15, 1
      %p68 = scmp.ne.s32.totalorder %s63, %s65
      %p69 = scmp.eq.s32.totalorder %s15, 0
      %p70 = por %p68, %p69
      %p71 = scmp.ne.s32.totalorder %s63, %s65
      %p72 = scmp.eq.s32.totalorder %s20, 1
      %p73 = por %p71, %p72
      %p74 = scmp.ne.s32.totalorder %s65, %s66
      %p75 = scmp.eq.s32.totalorder %s20, 0
      %p76 = por %p74, %p75
      %p77 = scmp.ne.s32.totalorder %s65, %s66
      %p78 = scmp.eq.s32.totalorder %s21, 1
      %p79 = por %p77, %p78
      %p81 = scmp.ne.s32.totalorder %s66, %s80
      %p82 = scmp.eq.s32.totalorder %s21, 0
      %p83 = por %p81, %p82
      %s84 = ssub.s32 %s22, %s34
      %p85 = scmp.eq.s32.totalorder %s84, 0
      %s87 = sadd.s32 %s86, 1
      %s88 = scalar_select %p85, %s86, %s87
      %p91 = pneg %p85
      %p92 = scmp.eq.s32.totalorder %s15, 1
      %p93 = por %p91, %p92
      %p94 = scmp.ne.s32.totalorder %s86, %s89
      %p95 = scmp.eq.s32.totalorder %s15, 0
      %p96 = por %p94, %p95
      %p97 = scmp.ne.s32.totalorder %s86, %s89
      %p98 = scmp.eq.s32.totalorder %s20, 1
      %p99 = por %p97, %p98
      %p100 = scmp.ne.s32.totalorder %s89, %s90
      %p101 = scmp.eq.s32.totalorder %s20, 0
      %p102 = por %p100, %p101
      %p103 = scmp.ne.s32.totalorder %s89, %s90
      %p104 = scmp.eq.s32.totalorder %s21, 1
      %p105 = por %p103, %p104
      %p107 = scmp.ne.s32.totalorder %s90, %s106
      %p108 = scmp.eq.s32.totalorder %s21, 0
      %p109 = por %p107, %p108
      %p110 = scmp.le.s32.totalorder 1, %s15
      %p111 = scmp.lt.s32.totalorder %s15, 3
      %p112 = pnand %p110, %p111
      %p113 = pneg %p112
      // Predicated region
      $region9: #{tpu_custom_call.1} parent=5 // pred_check
        _
      $region10: #{tpu_custom_call.1} parent=5 // pred_check_branch
        %115 = sbr.rel (%p112) target = $region12
      $region11: #{tpu_custom_call.1} parent=5 // pred_region
        %s116 = ssub.s32 %s15, 1
        // Predicated region
        $region13: #{tpu_custom_call.1} parent=11 // pred_check
          %p117 = pneg %p76
        $region14: #{tpu_custom_call.1} parent=11 // pred_check_branch
          %119 = sbr.rel (%p117) target = $region16
        $region15: #{tpu_custom_call.1} parent=11 // pred_region
          %s121 = ssub.s32 4096, 4096
          %122 = vsyncadd [#allocation6], %s121
          %s123 = sshll.u32 [#allocation5], 4
          %s124 = int_to_ptr.vmem [resolvable:$true] %s123
          %129 = dma.hbm_to_vmem [thread:$0]  %s1, 4096, %s124, [#allocation6], 64, 64, 4
        $region16: #{tpu_custom_call.1} parent=11 // pred_fallthru
          _
      $region12: #{tpu_custom_call.1} parent=5 // pred_fallthru
        _
      %p130 = scmp.lt.s32.totalorder %s15, 2
      // Predicated region
      $region17: #{tpu_custom_call.1} parent=5 // pred_check
        %p131 = pneg %p130
      $region18: #{tpu_custom_call.1} parent=5 // pred_check_branch
        %133 = sbr.rel (%p131) target = $region20
      $region19: #{tpu_custom_call.1} parent=5 // pred_region
        // Predicated region
        $region21: #{tpu_custom_call.1} parent=19 // pred_check
          %p134 = pneg %p49
        $region22: #{tpu_custom_call.1} parent=19 // pred_check_branch
          %136 = sbr.rel (%p134) target = $region24
        $region23: #{tpu_custom_call.1} parent=19 // pred_region
          %s137 = sand.u32 %s39, 1
          %s138 = scalar_lea.sflag [#allocation3], %s137
          %s139 = sand.u32 %s39, 1
          %s140 = smul.addr %s139, 256
          %s141 = scalar_lea.vmem [#allocation2], %s140
          %s142 = smul.u32 8, %s22
          %s143 = smul.u32 4, %s23
          %s145 = ssub.s32 4096, 4096
          %146 = vsyncadd %s138, %s145
          %s147 = smul.addr %s142, 4
          %s148 = sadd.s32 %s143, %s147
          %s149 = smul.addr %s148, 128
          %s150 = scalar_lea.hbm %s0, %s149
          %s151 = sshll.u32 %s141, 4
          %s152 = int_to_ptr.vmem [resolvable:$true] %s151
          %157 = dma.hbm_to_vmem [thread:$0]  %s150, 4096, %s152, %s138, 512, 512, 32
        $region24: #{tpu_custom_call.1} parent=19 // pred_fallthru
          _
      $region20: #{tpu_custom_call.1} parent=5 // pred_fallthru
        _
      %p158 = scmp.le.s32.totalorder 1, %s15
      %p159 = scmp.lt.s32.totalorder %s15, 3
      %p160 = pnand %p158, %p159
      %p161 = pneg %p160
      // Predicated region
      $region25: #{tpu_custom_call.1} parent=5 // pred_check
        _
      $region26: #{tpu_custom_call.1} parent=5 // pred_check_branch
        %163 = sbr.rel (%p160) target = $region28
      $region27: #{tpu_custom_call.1} parent=5 // pred_region
        %s164 = ssub.s32 %s15, 1
        %s165 = sand.u32 %s42, 1
        %s166 = scalar_lea.sflag [#allocation3], %s165
        %s167 = sand.u32 %s42, 1
        %s168 = smul.addr %s167, 256
        %s169 = scalar_lea.vmem [#allocation2], %s168
        // Predicated region
        $region29: #{tpu_custom_call.1} parent=27 // pred_check
          %p170 = pneg %p55
        $region30: #{tpu_custom_call.1} parent=27 // pred_check_branch
          %172 = sbr.rel (%p170) target = $region32
        $region31: #{tpu_custom_call.1} parent=27 // pred_region
          %173 = dma.done %s166, 4096
        $region32: #{tpu_custom_call.1} parent=27 // pred_fallthru
          _
        // Predicated region
        $region33: #{tpu_custom_call.1} parent=27 // pred_check
          %p174 = pneg %p76
        $region34: #{tpu_custom_call.1} parent=27 // pred_check_branch
          %176 = sbr.rel (%p174) target = $region36
        $region35: #{tpu_custom_call.1} parent=27 // pred_region
          %177 = dma.done [#allocation6], 4096
        $region36: #{tpu_custom_call.1} parent=27 // pred_fallthru
          _
        %s178 = sand.u32 %s42, 1
        %s179 = scalar_lea.sflag [#allocation3], %s178
        %s180 = sand.u32 %s42, 1
        %s181 = smul.addr %s180, 256
        %s182 = scalar_lea.vmem [#allocation2], %s181
        %p183 = pneg %p55
        %p184 = pneg %p52
        %p185 = pneg %p76
        %p186 = pneg %p73
        %p187 = pneg %p102
        %p188 = pneg %p99
        %s189 = sand.u32 %s89, 1
        %s190 = scalar_lea.sflag [#allocation4], %s189
        %s191 = sand.u32 %s89, 1
        %s192 = smul.addr %s191, 256
        %s193 = scalar_lea.vmem [#allocation7], %s192
        %s194 = smul.u32 8, %s24
        %s195 = smul.u32 4, %s25
        %s196 = smul.u32 32, %s24
        %p198 = scmp.eq.s32.totalorder %s25, 0
        // Predicated region
        $region37: #{tpu_custom_call.1} parent=27 // pred_check
          %p199 = pneg %p198
        $region38: #{tpu_custom_call.1} parent=27 // pred_check_branch
          %201 = sbr.rel (%p199) target = $region40
        $region39: #{tpu_custom_call.1} parent=27 // pred_region
          %202 = vst [vmem:[%s193] sm:$0xff] 0.0
          %203 = vst [vmem:[%s193 + $0x8] sm:$0xff] 0.0
          %204 = vst [vmem:[%s193 + $0x10] sm:$0xff] 0.0
          %205 = vst [vmem:[%s193 + $0x18] sm:$0xff] 0.0
          %206 = vst [vmem:[%s193 + $0x20] sm:$0xff] 0.0
          %207 = vst [vmem:[%s193 + $0x28] sm:$0xff] 0.0
          %208 = vst [vmem:[%s193 + $0x30] sm:$0xff] 0.0
          %209 = vst [vmem:[%s193 + $0x38] sm:$0xff] 0.0
          %210 = vst [vmem:[%s193 + $0x40] sm:$0xff] 0.0
          %211 = vst [vmem:[%s193 + $0x48] sm:$0xff] 0.0
          %212 = vst [vmem:[%s193 + $0x50] sm:$0xff] 0.0
          %213 = vst [vmem:[%s193 + $0x58] sm:$0xff] 0.0
          %214 = vst [vmem:[%s193 + $0x60] sm:$0xff] 0.0
          %215 = vst [vmem:[%s193 + $0x68] sm:$0xff] 0.0
          %216 = vst [vmem:[%s193 + $0x70] sm:$0xff] 0.0
          %217 = vst [vmem:[%s193 + $0x78] sm:$0xff] 0.0
          %218 = vst [vmem:[%s193 + $0x80] sm:$0xff] 0.0
          %219 = vst [vmem:[%s193 + $0x88] sm:$0xff] 0.0
          %220 = vst [vmem:[%s193 + $0x90] sm:$0xff] 0.0
          %221 = vst [vmem:[%s193 + $0x98] sm:$0xff] 0.0
          %222 = vst [vmem:[%s193 + $0xa0] sm:$0xff] 0.0
          %223 = vst [vmem:[%s193 + $0xa8] sm:$0xff] 0.0
          %224 = vst [vmem:[%s193 + $0xb0] sm:$0xff] 0.0
          %225 = vst [vmem:[%s193 + $0xb8] sm:$0xff] 0.0
          %226 = vst [vmem:[%s193 + $0xc0] sm:$0xff] 0.0
          %227 = vst [vmem:[%s193 + $0xc8] sm:$0xff] 0.0
          %228 = vst [vmem:[%s193 + $0xd0] sm:$0xff] 0.0
          %229 = vst [vmem:[%s193 + $0xd8] sm:$0xff] 0.0
          %230 = vst [vmem:[%s193 + $0xe0] sm:$0xff] 0.0
          %231 = vst [vmem:[%s193 + $0xe8] sm:$0xff] 0.0
          %232 = vst [vmem:[%s193 + $0xf0] sm:$0xff] 0.0
          %233 = vst [vmem:[%s193 + $0xf8] sm:$0xff] 0.0
        $region40: #{tpu_custom_call.1} parent=27 // pred_fallthru
          _
        %v234 = vld [vmem:[%s169] sm:$0xff]
        %v235 = vld [vmem:[%s169 + $0x8] sm:$0xff]
        %v236 = vld [vmem:[%s169 + $0x10] sm:$0xff]
        %v237 = vld [vmem:[%s169 + $0x18] sm:$0xff]
        %v238 = vld [vmem:[%s169 + $0x20] sm:$0xff]
        %v239 = vld [vmem:[%s169 + $0x28] sm:$0xff]
        %v240 = vld [vmem:[%s169 + $0x30] sm:$0xff]
        %v241 = vld [vmem:[%s169 + $0x38] sm:$0xff]
        %v242 = vld [vmem:[%s169 + $0x40] sm:$0xff]
        %v243 = vld [vmem:[%s169 + $0x48] sm:$0xff]
        %v244 = vld [vmem:[%s169 + $0x50] sm:$0xff]
        %v245 = vld [vmem:[%s169 + $0x58] sm:$0xff]
        %v246 = vld [vmem:[%s169 + $0x60] sm:$0xff]
        %v247 = vld [vmem:[%s169 + $0x68] sm:$0xff]
        %v248 = vld [vmem:[%s169 + $0x70] sm:$0xff]
        %v249 = vld [vmem:[%s169 + $0x78] sm:$0xff]
        %v250 = vld [vmem:[%s169 + $0x80] sm:$0xff]
        %v251 = vld [vmem:[%s169 + $0x88] sm:$0xff]
        %v252 = vld [vmem:[%s169 + $0x90] sm:$0xff]
        %v253 = vld [vmem:[%s169 + $0x98] sm:$0xff]
        %v254 = vld [vmem:[%s169 + $0xa0] sm:$0xff]
        %v255 = vld [vmem:[%s169 + $0xa8] sm:$0xff]
        %v256 = vld [vmem:[%s169 + $0xb0] sm:$0xff]
        %v257 = vld [vmem:[%s169 + $0xb8] sm:$0xff]
        %v258 = vld [vmem:[%s169 + $0xc0] sm:$0xff]
        %v259 = vld [vmem:[%s169 + $0xc8] sm:$0xff]
        %v260 = vld [vmem:[%s169 + $0xd0] sm:$0xff]
        %v261 = vld [vmem:[%s169 + $0xd8] sm:$0xff]
        %v262 = vld [vmem:[%s169 + $0xe0] sm:$0xff]
        %v263 = vld [vmem:[%s169 + $0xe8] sm:$0xff]
        %v264 = vld [vmem:[%s169 + $0xf0] sm:$0xff]
        %v265 = vld [vmem:[%s169 + $0xf8] sm:$0xff]
        %v266 = vunpack.c.l.s8.bf16 %v234
        %v267 = vunpack.c.l.s8.bf16 %v235
        %v268 = vunpack.c.l.s8.bf16 %v236
        %v269 = vunpack.c.l.s8.bf16 %v237
        %v270 = vunpack.c.h.s8.bf16 %v234
        %v271 = vunpack.c.h.s8.bf16 %v235
        %v272 = vunpack.c.h.s8.bf16 %v236
        %v273 = vunpack.c.h.s8.bf16 %v237
        %v274 = vunpack.c.l.s8.bf16 %v238
        %v275 = vunpack.c.l.s8.bf16 %v239
        %v276 = vunpack.c.l.s8.bf16 %v240
        %v277 = vunpack.c.l.s8.bf16 %v241
        %v278 = vunpack.c.h.s8.bf16 %v238
        %v279 = vunpack.c.h.s8.bf16 %v239
        %v280 = vunpack.c.h.s8.bf16 %v240
        %v281 = vunpack.c.h.s8.bf16 %v241
        %v282 = vunpack.c.l.s8.bf16 %v242
        %v283 = vunpack.c.l.s8.bf16 %v243
        %v284 = vunpack.c.l.s8.bf16 %v244
        %v285 = vunpack.c.l.s8.bf16 %v245
        %v286 = vunpack.c.h.s8.bf16 %v242
        %v287 = vunpack.c.h.s8.bf16 %v243
        %v288 = vunpack.c.h.s8.bf16 %v244
        %v289 = vunpack.c.h.s8.bf16 %v245
        %v290 = vunpack.c.l.s8.bf16 %v246
        %v291 = vunpack.c.l.s8.bf16 %v247
        %v292 = vunpack.c.l.s8.bf16 %v248
        %v293 = vunpack.c.l.s8.bf16 %v249
        %v294 = vunpack.c.h.s8.bf16 %v246
        %v295 = vunpack.c.h.s8.bf16 %v247
        %v296 = vunpack.c.h.s8.bf16 %v248
        %v297 = vunpack.c.h.s8.bf16 %v249
        %v298 = vunpack.c.l.s8.bf16 %v250
        %v299 = vunpack.c.l.s8.bf16 %v251
        %v300 = vunpack.c.l.s8.bf16 %v252
        %v301 = vunpack.c.l.s8.bf16 %v253
        %v302 = vunpack.c.h.s8.bf16 %v250
        %v303 = vunpack.c.h.s8.bf16 %v251
        %v304 = vunpack.c.h.s8.bf16 %v252
        %v305 = vunpack.c.h.s8.bf16 %v253
        %v306 = vunpack.c.l.s8.bf16 %v254
        %v307 = vunpack.c.l.s8.bf16 %v255
        %v308 = vunpack.c.l.s8.bf16 %v256
        %v309 = vunpack.c.l.s8.bf16 %v257
        %v310 = vunpack.c.h.s8.bf16 %v254
        %v311 = vunpack.c.h.s8.bf16 %v255
        %v312 = vunpack.c.h.s8.bf16 %v256
        %v313 = vunpack.c.h.s8.bf16 %v257
        %v314 = vunpack.c.l.s8.bf16 %v258
        %v315 = vunpack.c.l.s8.bf16 %v259
        %v316 = vunpack.c.l.s8.bf16 %v260
        %v317 = vunpack.c.l.s8.bf16 %v261
        %v318 = vunpack.c.h.s8.bf16 %v258
        %v319 = vunpack.c.h.s8.bf16 %v259
        %v320 = vunpack.c.h.s8.bf16 %v260
        %v321 = vunpack.c.h.s8.bf16 %v261
        %v322 = vunpack.c.l.s8.bf16 %v262
        %v323 = vunpack.c.l.s8.bf16 %v263
        %v324 = vunpack.c.l.s8.bf16 %v264
        %v325 = vunpack.c.l.s8.bf16 %v265
        %v326 = vunpack.c.h.s8.bf16 %v262
        %v327 = vunpack.c.h.s8.bf16 %v263
        %v328 = vunpack.c.h.s8.bf16 %v264
        %v329 = vunpack.c.h.s8.bf16 %v265
        %s330 = smul.u32 %s25, 512
        %s331 = sshra.s32 %s330, 3
        %s332 = sand.u32 %s330, 7
        %s333 = smul.addr %s331, 4
        %s334 = scalar_lea.vmem [#allocation5], %s333
        %v335 = vld [vmem:[%s334] sm:$0xf]
        %v336 = vld [vmem:[%s334 + $0x4] sm:$0xf]
        %v337 = vld [vmem:[%s334 + $0x8] sm:$0xf]
        %v338 = vld [vmem:[%s334 + $0xc] sm:$0xf]
        %v339 = vld [vmem:[%s334 + $0x10] sm:$0xf]
        %v340 = vld [vmem:[%s334 + $0x14] sm:$0xf]
        %v341 = vld [vmem:[%s334 + $0x18] sm:$0xf]
        %v342 = vld [vmem:[%s334 + $0x1c] sm:$0xf]
        %v343 = vld [vmem:[%s334 + $0x20] sm:$0xf]
        %v344 = vld [vmem:[%s334 + $0x24] sm:$0xf]
        %v345 = vld [vmem:[%s334 + $0x28] sm:$0xf]
        %v346 = vld [vmem:[%s334 + $0x2c] sm:$0xf]
        %v347 = vld [vmem:[%s334 + $0x30] sm:$0xf]
        %v348 = vld [vmem:[%s334 + $0x34] sm:$0xf]
        %v349 = vld [vmem:[%s334 + $0x38] sm:$0xf]
        %v350 = vld [vmem:[%s334 + $0x3c] sm:$0xf]
        %v351 = vld [vmem:[%s334 + $0x40] sm:$0xf]
        %v352 = vld [vmem:[%s334 + $0x44] sm:$0xf]
        %v353 = vld [vmem:[%s334 + $0x48] sm:$0xf]
        %v354 = vld [vmem:[%s334 + $0x4c] sm:$0xf]
        %v355 = vld [vmem:[%s334 + $0x50] sm:$0xf]
        %v356 = vld [vmem:[%s334 + $0x54] sm:$0xf]
        %v357 = vld [vmem:[%s334 + $0x58] sm:$0xf]
        %v358 = vld [vmem:[%s334 + $0x5c] sm:$0xf]
        %v359 = vld [vmem:[%s334 + $0x60] sm:$0xf]
        %v360 = vld [vmem:[%s334 + $0x64] sm:$0xf]
        %v361 = vld [vmem:[%s334 + $0x68] sm:$0xf]
        %v362 = vld [vmem:[%s334 + $0x6c] sm:$0xf]
        %v363 = vld [vmem:[%s334 + $0x70] sm:$0xf]
        %v364 = vld [vmem:[%s334 + $0x74] sm:$0xf]
        %v365 = vld [vmem:[%s334 + $0x78] sm:$0xf]
        %v366 = vld [vmem:[%s334 + $0x7c] sm:$0xf]
        %v367 = vld [vmem:[%s334 + $0x80] sm:$0xf]
        %v368 = vld [vmem:[%s334 + $0x84] sm:$0xf]
        %v369 = vld [vmem:[%s334 + $0x88] sm:$0xf]
        %v370 = vld [vmem:[%s334 + $0x8c] sm:$0xf]
        %v371 = vld [vmem:[%s334 + $0x90] sm:$0xf]
        %v372 = vld [vmem:[%s334 + $0x94] sm:$0xf]
        %v373 = vld [vmem:[%s334 + $0x98] sm:$0xf]
        %v374 = vld [vmem:[%s334 + $0x9c] sm:$0xf]
        %v375 = vld [vmem:[%s334 + $0xa0] sm:$0xf]
        %v376 = vld [vmem:[%s334 + $0xa4] sm:$0xf]
        %v377 = vld [vmem:[%s334 + $0xa8] sm:$0xf]
        %v378 = vld [vmem:[%s334 + $0xac] sm:$0xf]
        %v379 = vld [vmem:[%s334 + $0xb0] sm:$0xf]
        %v380 = vld [vmem:[%s334 + $0xb4] sm:$0xf]
        %v381 = vld [vmem:[%s334 + $0xb8] sm:$0xf]
        %v382 = vld [vmem:[%s334 + $0xbc] sm:$0xf]
        %v383 = vld [vmem:[%s334 + $0xc0] sm:$0xf]
        %v384 = vld [vmem:[%s334 + $0xc4] sm:$0xf]
        %v385 = vld [vmem:[%s334 + $0xc8] sm:$0xf]
        %v386 = vld [vmem:[%s334 + $0xcc] sm:$0xf]
        %v387 = vld [vmem:[%s334 + $0xd0] sm:$0xf]
        %v388 = vld [vmem:[%s334 + $0xd4] sm:$0xf]
        %v389 = vld [vmem:[%s334 + $0xd8] sm:$0xf]
        %v390 = vld [vmem:[%s334 + $0xdc] sm:$0xf]
        %v391 = vld [vmem:[%s334 + $0xe0] sm:$0xf]
        %v392 = vld [vmem:[%s334 + $0xe4] sm:$0xf]
        %v393 = vld [vmem:[%s334 + $0xe8] sm:$0xf]
        %v394 = vld [vmem:[%s334 + $0xec] sm:$0xf]
        %v395 = vld [vmem:[%s334 + $0xf0] sm:$0xf]
        %v396 = vld [vmem:[%s334 + $0xf4] sm:$0xf]
        %v397 = vld [vmem:[%s334 + $0xf8] sm:$0xf]
        %v398 = vld [vmem:[%s334 + $0xfc] sm:$0xf]
        %v399 = vld [vmem:[%s193] sm:$0xff]
        %v400 = vld [vmem:[%s193 + $0x8] sm:$0xff]
        %v401 = vld [vmem:[%s193 + $0x10] sm:$0xff]
        %v402 = vld [vmem:[%s193 + $0x18] sm:$0xff]
        %v403 = vld [vmem:[%s193 + $0x20] sm:$0xff]
        %v404 = vld [vmem:[%s193 + $0x28] sm:$0xff]
        %v405 = vld [vmem:[%s193 + $0x30] sm:$0xff]
        %v406 = vld [vmem:[%s193 + $0x38] sm:$0xff]
        %v407 = vld [vmem:[%s193 + $0x40] sm:$0xff]
        %v408 = vld [vmem:[%s193 + $0x48] sm:$0xff]
        %v409 = vld [vmem:[%s193 + $0x50] sm:$0xff]
        %v410 = vld [vmem:[%s193 + $0x58] sm:$0xff]
        %v411 = vld [vmem:[%s193 + $0x60] sm:$0xff]
        %v412 = vld [vmem:[%s193 + $0x68] sm:$0xff]
        %v413 = vld [vmem:[%s193 + $0x70] sm:$0xff]
        %v414 = vld [vmem:[%s193 + $0x78] sm:$0xff]
        %v415 = vld [vmem:[%s193 + $0x80] sm:$0xff]
        %v416 = vld [vmem:[%s193 + $0x88] sm:$0xff]
        %v417 = vld [vmem:[%s193 + $0x90] sm:$0xff]
        %v418 = vld [vmem:[%s193 + $0x98] sm:$0xff]
        %v419 = vld [vmem:[%s193 + $0xa0] sm:$0xff]
        %v420 = vld [vmem:[%s193 + $0xa8] sm:$0xff]
        %v421 = vld [vmem:[%s193 + $0xb0] sm:$0xff]
        %v422 = vld [vmem:[%s193 + $0xb8] sm:$0xff]
        %v423 = vld [vmem:[%s193 + $0xc0] sm:$0xff]
        %v424 = vld [vmem:[%s193 + $0xc8] sm:$0xff]
        %v425 = vld [vmem:[%s193 + $0xd0] sm:$0xff]
        %v426 = vld [vmem:[%s193 + $0xd8] sm:$0xff]
        %v427 = vld [vmem:[%s193 + $0xe0] sm:$0xff]
        %v428 = vld [vmem:[%s193 + $0xe8] sm:$0xff]
        %v429 = vld [vmem:[%s193 + $0xf0] sm:$0xff]
        %v430 = vld [vmem:[%s193 + $0xf8] sm:$0xff]
        %v495 = vunpack.c.l.b16 %v335
        %v496 = vunpack.c.l.b16 %v336
        %v497 = vunpack.c.l.b16 %v337
        %v498 = vunpack.c.l.b16 %v338
        %v499 = vunpack.c.l.b16 %v339
        %v500 = vunpack.c.l.b16 %v340
        %v501 = vunpack.c.l.b16 %v341
        %v502 = vunpack.c.l.b16 %v342
        %v503 = vunpack.c.l.b16 %v343
        %v504 = vunpack.c.l.b16 %v344
        %v505 = vunpack.c.l.b16 %v345
        %v506 = vunpack.c.l.b16 %v346
        %v507 = vunpack.c.l.b16 %v347
        %v508 = vunpack.c.l.b16 %v348
        %v509 = vunpack.c.l.b16 %v349
        %v510 = vunpack.c.l.b16 %v350
        %v511 = vunpack.c.l.b16 %v351
        %v512 = vunpack.c.l.b16 %v352
        %v513 = vunpack.c.l.b16 %v353
        %v514 = vunpack.c.l.b16 %v354
        %v515 = vunpack.c.l.b16 %v355
        %v516 = vunpack.c.l.b16 %v356
        %v517 = vunpack.c.l.b16 %v357
        %v518 = vunpack.c.l.b16 %v358
        %v519 = vunpack.c.l.b16 %v359
        %v520 = vunpack.c.l.b16 %v360
        %v521 = vunpack.c.l.b16 %v361
        %v522 = vunpack.c.l.b16 %v362
        %v523 = vunpack.c.l.b16 %v363
        %v524 = vunpack.c.l.b16 %v364
        %v525 = vunpack.c.l.b16 %v365
        %v526 = vunpack.c.l.b16 %v366
        %v527 = vunpack.c.l.b16 %v367
        %v528 = vunpack.c.l.b16 %v368
        %v529 = vunpack.c.l.b16 %v369
        %v530 = vunpack.c.l.b16 %v370
        %v531 = vunpack.c.l.b16 %v371
        %v532 = vunpack.c.l.b16 %v372
        %v533 = vunpack.c.l.b16 %v373
        %v534 = vunpack.c.l.b16 %v374
        %v535 = vunpack.c.l.b16 %v375
        %v536 = vunpack.c.l.b16 %v376
        %v537 = vunpack.c.l.b16 %v377
        %v538 = vunpack.c.l.b16 %v378
        %v539 = vunpack.c.l.b16 %v379
        %v540 = vunpack.c.l.b16 %v380
        %v541 = vunpack.c.l.b16 %v381
        %v542 = vunpack.c.l.b16 %v382
        %v543 = vunpack.c.l.b16 %v383
        %v544 = vunpack.c.l.b16 %v384
        %v545 = vunpack.c.l.b16 %v385
        %v546 = vunpack.c.l.b16 %v386
        %v547 = vunpack.c.l.b16 %v387
        %v548 = vunpack.c.l.b16 %v388
        %v549 = vunpack.c.l.b16 %v389
        %v550 = vunpack.c.l.b16 %v390
        %v551 = vunpack.c.l.b16 %v391
        %v552 = vunpack.c.l.b16 %v392
        %v553 = vunpack.c.l.b16 %v393
        %v554 = vunpack.c.l.b16 %v394
        %v555 = vunpack.c.l.b16 %v395
        %v556 = vunpack.c.l.b16 %v396
        %v557 = vunpack.c.l.b16 %v397
        %v558 = vunpack.c.l.b16 %v398
        %v559 = vpack.c.b16 %v496, %v495
        %v560 = vpack.c.b16 %v498, %v497
        %v561 = vpack.c.b16 %v500, %v499
        %v562 = vpack.c.b16 %v502, %v501
        %v563 = vpack.c.b16 %v504, %v503
        %v564 = vpack.c.b16 %v506, %v505
        %v565 = vpack.c.b16 %v508, %v507
        %v566 = vpack.c.b16 %v510, %v509
        %v567 = vpack.c.b16 %v512, %v511
        %v568 = vpack.c.b16 %v514, %v513
        %v569 = vpack.c.b16 %v516, %v515
        %v570 = vpack.c.b16 %v518, %v517
        %v571 = vpack.c.b16 %v520, %v519
        %v572 = vpack.c.b16 %v522, %v521
        %v573 = vpack.c.b16 %v524, %v523
        %v574 = vpack.c.b16 %v526, %v525
        %v575 = vpack.c.b16 %v528, %v527
        %v576 = vpack.c.b16 %v530, %v529
        %v577 = vpack.c.b16 %v532, %v531
        %v578 = vpack.c.b16 %v534, %v533
        %v579 = vpack.c.b16 %v536, %v535
        %v580 = vpack.c.b16 %v538, %v537
        %v581 = vpack.c.b16 %v540, %v539
        %v582 = vpack.c.b16 %v542, %v541
        %v583 = vpack.c.b16 %v544, %v543
        %v584 = vpack.c.b16 %v546, %v545
        %v585 = vpack.c.b16 %v548, %v547
        %v586 = vpack.c.b16 %v550, %v549
        %v587 = vpack.c.b16 %v552, %v551
        %v588 = vpack.c.b16 %v554, %v553
        %v589 = vpack.c.b16 %v556, %v555
        %v590 = vpack.c.b16 %v558, %v557
        %623 = vmatprep.subr.bf16.mxu0 0
        %624 = vmatpush1.bf16.msra.mxu0 %v566
        %625 = vmatprep.subr.bf16.mxu0 0
        %626 = vmatpush1.bf16.msra.mxu0 %v565
        %627 = vmatprep.subr.bf16.mxu0 0
        %628 = vmatpush1.bf16.msra.mxu0 %v564
        %629 = vmatprep.subr.bf16.mxu0 0
        %630 = vmatpush1.bf16.msra.mxu0 %v563
        %631 = vmatprep.subr.bf16.mxu0 0
        %632 = vmatpush1.bf16.msra.mxu0 %v562
        %633 = vmatprep.subr.bf16.mxu0 0
        %634 = vmatpush1.bf16.msra.mxu0 %v561
        %635 = vmatprep.subr.bf16.mxu0 0
        %636 = vmatpush1.bf16.msra.mxu0 %v560
        %637 = vmatprep.subr.bf16.mxu0 0
        %638 = vmatpush1.bf16.msra.mxu0 %v559
        %639 = vmatprep.subr.bf16.mxu0 0
        %640 = vmatpush2.bf16.msra.mxu0 %v574
        %641 = vmatprep.subr.bf16.mxu0 0
        %642 = vmatpush2.bf16.msra.mxu0 %v573
        %643 = vmatprep.subr.bf16.mxu0 0
        %644 = vmatpush2.bf16.msra.mxu0 %v572
        %645 = vmatprep.subr.bf16.mxu0 0
        %646 = vmatpush2.bf16.msra.mxu0 %v571
        %647 = vmatprep.subr.bf16.mxu0 0
        %648 = vmatpush2.bf16.msra.mxu0 %v570
        %649 = vmatprep.subr.bf16.mxu0 0
        %650 = vmatpush2.bf16.msra.mxu0 %v569
        %651 = vmatprep.subr.bf16.mxu0 0
        %652 = vmatpush2.bf16.msra.mxu0 %v568
        %653 = vmatprep.subr.bf16.mxu0 0
        %654 = vmatpush2.bf16.msra.mxu0 %v567
        %655 = vmatprep.mubr.bf16.mxu0 %v267
        %656 = vmatmul.mubr.bf16.gmra.mxu0 %v266
        %v657 = vpop.f32.mrf.mxu0
        %v658 = vadd.f32 0.0, %v657
        %v659 = vpop.f32.mrf.mxu0
        %v660 = vpop.f32.mrf.mxu0
        %v661 = vadd.f32 0.0, %v660
        %v662 = vpop.f32.mrf.mxu0
        %663 = vmatprep.mubr.bf16.mxu0 %v271
        %664 = vmatmul.mubr.bf16.gmra.mxu0 %v270
        %v665 = vpop.f32.mrf.mxu0
        %v666 = vadd.f32 0.0, %v665
        %v667 = vpop.f32.mrf.mxu0
        %v668 = vpop.f32.mrf.mxu0
        %v669 = vadd.f32 0.0, %v668
        %v670 = vpop.f32.mrf.mxu0
        %671 = vmatprep.mubr.bf16.mxu0 %v275
        %672 = vmatmul.mubr.bf16.gmra.mxu0 %v274
        %v673 = vpop.f32.mrf.mxu0
        %v674 = vadd.f32 0.0, %v673
        %v675 = vpop.f32.mrf.mxu0
        %v676 = vpop.f32.mrf.mxu0
        %v677 = vadd.f32 0.0, %v676
        %v678 = vpop.f32.mrf.mxu0
        %679 = vmatprep.mubr.bf16.mxu0 %v279
        %680 = vmatmul.mubr.bf16.gmra.mxu0 %v278
        %v681 = vpop.f32.mrf.mxu0
        %v682 = vadd.f32 0.0, %v681
        %v683 = vpop.f32.mrf.mxu0
        %v684 = vpop.f32.mrf.mxu0
        %v685 = vadd.f32 0.0, %v684
        %v686 = vpop.f32.mrf.mxu0
        %687 = vmatprep.mubr.bf16.mxu0 %v283
        %688 = vmatmul.mubr.bf16.gmra.mxu0 %v282
        %v689 = vpop.f32.mrf.mxu0
        %v690 = vadd.f32 0.0, %v689
        %v691 = vpop.f32.mrf.mxu0
        %v692 = vpop.f32.mrf.mxu0
        %v693 = vadd.f32 0.0, %v692
        %v694 = vpop.f32.mrf.mxu0
        %695 = vmatprep.mubr.bf16.mxu0 %v287
        %696 = vmatmul.mubr.bf16.gmra.mxu0 %v286
        %v697 = vpop.f32.mrf.mxu0
        %v698 = vadd.f32 0.0, %v697
        %v699 = vpop.f32.mrf.mxu0
        %v700 = vpop.f32.mrf.mxu0
        %v701 = vadd.f32 0.0, %v700
        %v702 = vpop.f32.mrf.mxu0
        %703 = vmatprep.mubr.bf16.mxu0 %v291
        %704 = vmatmul.mubr.bf16.gmra.mxu0 %v290
        %v705 = vpop.f32.mrf.mxu0
        %v706 = vadd.f32 0.0, %v705
        %v707 = vpop.f32.mrf.mxu0
        %v708 = vpop.f32.mrf.mxu0
        %v709 = vadd.f32 0.0, %v708
        %v710 = vpop.f32.mrf.mxu0
        %711 = vmatprep.mubr.bf16.mxu0 %v295
        %712 = vmatmul.mubr.bf16.gmra.mxu0 %v294
        %v713 = vpop.f32.mrf.mxu0
        %v714 = vadd.f32 0.0, %v713
        %v715 = vpop.f32.mrf.mxu0
        %v716 = vpop.f32.mrf.mxu0
        %v717 = vadd.f32 0.0, %v716
        %v718 = vpop.f32.mrf.mxu0
        %719 = vmatprep.mubr.bf16.mxu0 %v299
        %720 = vmatmul.mubr.bf16.gmra.mxu0 %v298
        %v721 = vpop.f32.mrf.mxu0
        %v722 = vadd.f32 0.0, %v721
        %v723 = vpop.f32.mrf.mxu0
        %v724 = vpop.f32.mrf.mxu0
        %v725 = vadd.f32 0.0, %v724
        %v726 = vpop.f32.mrf.mxu0
        %727 = vmatprep.mubr.bf16.mxu0 %v303
        %728 = vmatmul.mubr.bf16.gmra.mxu0 %v302
        %v729 = vpop.f32.mrf.mxu0
        %v730 = vadd.f32 0.0, %v729
        %v731 = vpop.f32.mrf.mxu0
        %v732 = vpop.f32.mrf.mxu0
        %v733 = vadd.f32 0.0, %v732
        %v734 = vpop.f32.mrf.mxu0
        %735 = vmatprep.mubr.bf16.mxu0 %v307
        %736 = vmatmul.mubr.bf16.gmra.mxu0 %v306
        %v737 = vpop.f32.mrf.mxu0
        %v738 = vadd.f32 0.0, %v737
        %v739 = vpop.f32.mrf.mxu0
        %v740 = vpop.f32.mrf.mxu0
        %v741 = vadd.f32 0.0, %v740
        %v742 = vpop.f32.mrf.mxu0
        %743 = vmatprep.mubr.bf16.mxu0 %v311
        %744 = vmatmul.mubr.bf16.gmra.mxu0 %v310
        %v745 = vpop.f32.mrf.mxu0
        %v746 = vadd.f32 0.0, %v745
        %v747 = vpop.f32.mrf.mxu0
        %v748 = vpop.f32.mrf.mxu0
        %v749 = vadd.f32 0.0, %v748
        %v750 = vpop.f32.mrf.mxu0
        %751 = vmatprep.mubr.bf16.mxu0 %v315
        %752 = vmatmul.mubr.bf16.gmra.mxu0 %v314
        %v753 = vpop.f32.mrf.mxu0
        %v754 = vadd.f32 0.0, %v753
        %v755 = vpop.f32.mrf.mxu0
        %v756 = vpop.f32.mrf.mxu0
        %v757 = vadd.f32 0.0, %v756
        %v758 = vpop.f32.mrf.mxu0
        %759 = vmatprep.mubr.bf16.mxu0 %v319
        %760 = vmatmul.mubr.bf16.gmra.mxu0 %v318
        %v761 = vpop.f32.mrf.mxu0
        %v762 = vadd.f32 0.0, %v761
        %v763 = vpop.f32.mrf.mxu0
        %v764 = vpop.f32.mrf.mxu0
        %v765 = vadd.f32 0.0, %v764
        %v766 = vpop.f32.mrf.mxu0
        %767 = vmatprep.mubr.bf16.mxu0 %v323
        %768 = vmatmul.mubr.bf16.gmra.mxu0 %v322
        %v769 = vpop.f32.mrf.mxu0
        %v770 = vadd.f32 0.0, %v769
        %v771 = vpop.f32.mrf.mxu0
        %v772 = vpop.f32.mrf.mxu0
        %v773 = vadd.f32 0.0, %v772
        %v774 = vpop.f32.mrf.mxu0
        %775 = vmatprep.mubr.bf16.mxu0 %v327
        %776 = vmatmul.mubr.bf16.gmra.mxu0 %v326
        %v777 = vpop.f32.mrf.mxu0
        %v778 = vadd.f32 0.0, %v777
        %v779 = vpop.f32.mrf.mxu0
        %v780 = vpop.f32.mrf.mxu0
        %v781 = vadd.f32 0.0, %v780
        %v782 = vpop.f32.mrf.mxu0
        %783 = vdwg.mxu0
        %784 = vmatprep.subr.bf16.mxu0 0
        %785 = vmatpush1.bf16.msra.mxu0 %v582
        %786 = vmatprep.subr.bf16.mxu0 0
        %787 = vmatpush1.bf16.msra.mxu0 %v581
        %788 = vmatprep.subr.bf16.mxu0 0
        %789 = vmatpush1.bf16.msra.mxu0 %v580
        %790 = vmatprep.subr.bf16.mxu0 0
        %791 = vmatpush1.bf16.msra.mxu0 %v579
        %792 = vmatprep.subr.bf16.mxu0 0
        %793 = vmatpush1.bf16.msra.mxu0 %v578
        %794 = vmatprep.subr.bf16.mxu0 0
        %795 = vmatpush1.bf16.msra.mxu0 %v577
        %796 = vmatprep.subr.bf16.mxu0 0
        %797 = vmatpush1.bf16.msra.mxu0 %v576
        %798 = vmatprep.subr.bf16.mxu0 0
        %799 = vmatpush1.bf16.msra.mxu0 %v575
        %800 = vmatprep.subr.bf16.mxu0 0
        %801 = vmatpush2.bf16.msra.mxu0 %v590
        %802 = vmatprep.subr.bf16.mxu0 0
        %803 = vmatpush2.bf16.msra.mxu0 %v589
        %804 = vmatprep.subr.bf16.mxu0 0
        %805 = vmatpush2.bf16.msra.mxu0 %v588
        %806 = vmatprep.subr.bf16.mxu0 0
        %807 = vmatpush2.bf16.msra.mxu0 %v587
        %808 = vmatprep.subr.bf16.mxu0 0
        %809 = vmatpush2.bf16.msra.mxu0 %v586
        %810 = vmatprep.subr.bf16.mxu0 0
        %811 = vmatpush2.bf16.msra.mxu0 %v585
        %812 = vmatprep.subr.bf16.mxu0 0
        %813 = vmatpush2.bf16.msra.mxu0 %v584
        %814 = vmatprep.subr.bf16.mxu0 0
        %815 = vmatpush2.bf16.msra.mxu0 %v583
        %816 = vmatprep.mubr.bf16.mxu0 %v269
        %817 = vmatmul.mubr.bf16.gmra.mxu0 %v268
        %v818 = vpop.f32.mrf.mxu0
        %v819 = vadd.f32 %v658, %v818
        %v820 = vpop.f32.mrf.mxu0
        %v821 = vpop.f32.mrf.mxu0
        %v822 = vadd.f32 %v661, %v821
        %v823 = vpop.f32.mrf.mxu0
        %824 = vmatprep.mubr.bf16.mxu0 %v273
        %825 = vmatmul.mubr.bf16.gmra.mxu0 %v272
        %v826 = vpop.f32.mrf.mxu0
        %v827 = vadd.f32 %v666, %v826
        %v828 = vpop.f32.mrf.mxu0
        %v829 = vpop.f32.mrf.mxu0
        %v830 = vadd.f32 %v669, %v829
        %v831 = vpop.f32.mrf.mxu0
        %832 = vmatprep.mubr.bf16.mxu0 %v277
        %833 = vmatmul.mubr.bf16.gmra.mxu0 %v276
        %v834 = vpop.f32.mrf.mxu0
        %v835 = vadd.f32 %v674, %v834
        %v836 = vpop.f32.mrf.mxu0
        %v837 = vpop.f32.mrf.mxu0
        %v838 = vadd.f32 %v677, %v837
        %v839 = vpop.f32.mrf.mxu0
        %840 = vmatprep.mubr.bf16.mxu0 %v281
        %841 = vmatmul.mubr.bf16.gmra.mxu0 %v280
        %v842 = vpop.f32.mrf.mxu0
        %v843 = vadd.f32 %v682, %v842
        %v844 = vpop.f32.mrf.mxu0
        %v845 = vpop.f32.mrf.mxu0
        %v846 = vadd.f32 %v685, %v845
        %v847 = vpop.f32.mrf.mxu0
        %848 = vmatprep.mubr.bf16.mxu0 %v285
        %849 = vmatmul.mubr.bf16.gmra.mxu0 %v284
        %v850 = vpop.f32.mrf.mxu0
        %v851 = vadd.f32 %v690, %v850
        %v852 = vpop.f32.mrf.mxu0
        %v853 = vpop.f32.mrf.mxu0
        %v854 = vadd.f32 %v693, %v853
        %v855 = vpop.f32.mrf.mxu0
        %856 = vmatprep.mubr.bf16.mxu0 %v289
        %857 = vmatmul.mubr.bf16.gmra.mxu0 %v288
        %v858 = vpop.f32.mrf.mxu0
        %v859 = vadd.f32 %v698, %v858
        %v860 = vpop.f32.mrf.mxu0
        %v861 = vpop.f32.mrf.mxu0
        %v862 = vadd.f32 %v701, %v861
        %v863 = vpop.f32.mrf.mxu0
        %864 = vmatprep.mubr.bf16.mxu0 %v293
        %865 = vmatmul.mubr.bf16.gmra.mxu0 %v292
        %v866 = vpop.f32.mrf.mxu0
        %v867 = vadd.f32 %v706, %v866
        %v868 = vpop.f32.mrf.mxu0
        %v869 = vpop.f32.mrf.mxu0
        %v870 = vadd.f32 %v709, %v869
        %v871 = vpop.f32.mrf.mxu0
        %872 = vmatprep.mubr.bf16.mxu0 %v297
        %873 = vmatmul.mubr.bf16.gmra.mxu0 %v296
        %v874 = vpop.f32.mrf.mxu0
        %v875 = vadd.f32 %v714, %v874
        %v876 = vpop.f32.mrf.mxu0
        %v877 = vpop.f32.mrf.mxu0
        %v878 = vadd.f32 %v717, %v877
        %v879 = vpop.f32.mrf.mxu0
        %880 = vmatprep.mubr.bf16.mxu0 %v301
        %881 = vmatmul.mubr.bf16.gmra.mxu0 %v300
        %v882 = vpop.f32.mrf.mxu0
        %v883 = vadd.f32 %v722, %v882
        %v884 = vpop.f32.mrf.mxu0
        %v885 = vpop.f32.mrf.mxu0
        %v886 = vadd.f32 %v725, %v885
        %v887 = vpop.f32.mrf.mxu0
        %888 = vmatprep.mubr.bf16.mxu0 %v305
        %889 = vmatmul.mubr.bf16.gmra.mxu0 %v304
        %v890 = vpop.f32.mrf.mxu0
        %v891 = vadd.f32 %v730, %v890
        %v892 = vpop.f32.mrf.mxu0
        %v893 = vpop.f32.mrf.mxu0
        %v894 = vadd.f32 %v733, %v893
        %v895 = vpop.f32.mrf.mxu0
        %896 = vmatprep.mubr.bf16.mxu0 %v309
        %897 = vmatmul.mubr.bf16.gmra.mxu0 %v308
        %v898 = vpop.f32.mrf.mxu0
        %v899 = vadd.f32 %v738, %v898
        %v900 = vpop.f32.mrf.mxu0
        %v901 = vpop.f32.mrf.mxu0
        %v902 = vadd.f32 %v741, %v901
        %v903 = vpop.f32.mrf.mxu0
        %904 = vmatprep.mubr.bf16.mxu0 %v313
        %905 = vmatmul.mubr.bf16.gmra.mxu0 %v312
        %v906 = vpop.f32.mrf.mxu0
        %v907 = vadd.f32 %v746, %v906
        %v908 = vpop.f32.mrf.mxu0
        %v909 = vpop.f32.mrf.mxu0
        %v910 = vadd.f32 %v749, %v909
        %v911 = vpop.f32.mrf.mxu0
        %912 = vmatprep.mubr.bf16.mxu0 %v317
        %913 = vmatmul.mubr.bf16.gmra.mxu0 %v316
        %v914 = vpop.f32.mrf.mxu0
        %v915 = vadd.f32 %v754, %v914
        %v916 = vpop.f32.mrf.mxu0
        %v917 = vpop.f32.mrf.mxu0
        %v918 = vadd.f32 %v757, %v917
        %v919 = vpop.f32.mrf.mxu0
        %920 = vmatprep.mubr.bf16.mxu0 %v321
        %921 = vmatmul.mubr.bf16.gmra.mxu0 %v320
        %v922 = vpop.f32.mrf.mxu0
        %v923 = vadd.f32 %v762, %v922
        %v924 = vpop.f32.mrf.mxu0
        %v925 = vpop.f32.mrf.mxu0
        %v926 = vadd.f32 %v765, %v925
        %v927 = vpop.f32.mrf.mxu0
        %928 = vmatprep.mubr.bf16.mxu0 %v325
        %929 = vmatmul.mubr.bf16.gmra.mxu0 %v324
        %v930 = vpop.f32.mrf.mxu0
        %v931 = vadd.f32 %v770, %v930
        %v932 = vpop.f32.mrf.mxu0
        %v933 = vpop.f32.mrf.mxu0
        %v934 = vadd.f32 %v773, %v933
        %v935 = vpop.f32.mrf.mxu0
        %936 = vmatprep.mubr.bf16.mxu0 %v329
        %937 = vmatmul.mubr.bf16.gmra.mxu0 %v328
        %v938 = vpop.f32.mrf.mxu0
        %v939 = vadd.f32 %v778, %v938
        %v940 = vpop.f32.mrf.mxu0
        %v941 = vpop.f32.mrf.mxu0
        %v942 = vadd.f32 %v781, %v941
        %v943 = vpop.f32.mrf.mxu0
        %944 = vdwg.mxu0
        %v945 = vadd.f32 %v399, %v819
        %v946 = vadd.f32 %v400, %v822
        %v947 = vadd.f32 %v401, %v827
        %v948 = vadd.f32 %v402, %v830
        %v949 = vadd.f32 %v403, %v835
        %v950 = vadd.f32 %v404, %v838
        %v951 = vadd.f32 %v405, %v843
        %v952 = vadd.f32 %v406, %v846
        %v953 = vadd.f32 %v407, %v851
        %v954 = vadd.f32 %v408, %v854
        %v955 = vadd.f32 %v409, %v859
        %v956 = vadd.f32 %v410, %v862
        %v957 = vadd.f32 %v411, %v867
        %v958 = vadd.f32 %v412, %v870
        %v959 = vadd.f32 %v413, %v875
        %v960 = vadd.f32 %v414, %v878
        %v961 = vadd.f32 %v415, %v883
        %v962 = vadd.f32 %v416, %v886
        %v963 = vadd.f32 %v417, %v891
        %v964 = vadd.f32 %v418, %v894
        %v965 = vadd.f32 %v419, %v899
        %v966 = vadd.f32 %v420, %v902
        %v967 = vadd.f32 %v421, %v907
        %v968 = vadd.f32 %v422, %v910
        %v969 = vadd.f32 %v423, %v915
        %v970 = vadd.f32 %v424, %v918
        %v971 = vadd.f32 %v425, %v923
        %v972 = vadd.f32 %v426, %v926
        %v973 = vadd.f32 %v427, %v931
        %v974 = vadd.f32 %v428, %v934
        %v975 = vadd.f32 %v429, %v939
        %v976 = vadd.f32 %v430, %v942
        %977 = vst [vmem:[%s193] sm:$0xff] %v945
        %978 = vst [vmem:[%s193 + $0x8] sm:$0xff] %v946
        %979 = vst [vmem:[%s193 + $0x10] sm:$0xff] %v947
        %980 = vst [vmem:[%s193 + $0x18] sm:$0xff] %v948
        %981 = vst [vmem:[%s193 + $0x20] sm:$0xff] %v949
        %982 = vst [vmem:[%s193 + $0x28] sm:$0xff] %v950
        %983 = vst [vmem:[%s193 + $0x30] sm:$0xff] %v951
        %984 = vst [vmem:[%s193 + $0x38] sm:$0xff] %v952
        %985 = vst [vmem:[%s193 + $0x40] sm:$0xff] %v953
        %986 = vst [vmem:[%s193 + $0x48] sm:$0xff] %v954
        %987 = vst [vmem:[%s193 + $0x50] sm:$0xff] %v955
        %988 = vst [vmem:[%s193 + $0x58] sm:$0xff] %v956
        %989 = vst [vmem:[%s193 + $0x60] sm:$0xff] %v957
        %990 = vst [vmem:[%s193 + $0x68] sm:$0xff] %v958
        %991 = vst [vmem:[%s193 + $0x70] sm:$0xff] %v959
        %992 = vst [vmem:[%s193 + $0x78] sm:$0xff] %v960
        %993 = vst [vmem:[%s193 + $0x80] sm:$0xff] %v961
        %994 = vst [vmem:[%s193 + $0x88] sm:$0xff] %v962
        %995 = vst [vmem:[%s193 + $0x90] sm:$0xff] %v963
        %996 = vst [vmem:[%s193 + $0x98] sm:$0xff] %v964
        %997 = vst [vmem:[%s193 + $0xa0] sm:$0xff] %v965
        %998 = vst [vmem:[%s193 + $0xa8] sm:$0xff] %v966
        %999 = vst [vmem:[%s193 + $0xb0] sm:$0xff] %v967
        %1000 = vst [vmem:[%s193 + $0xb8] sm:$0xff] %v968
        %1001 = vst [vmem:[%s193 + $0xc0] sm:$0xff] %v969
        %1002 = vst [vmem:[%s193 + $0xc8] sm:$0xff] %v970
        %1003 = vst [vmem:[%s193 + $0xd0] sm:$0xff] %v971
        %1004 = vst [vmem:[%s193 + $0xd8] sm:$0xff] %v972
        %1005 = vst [vmem:[%s193 + $0xe0] sm:$0xff] %v973
        %1006 = vst [vmem:[%s193 + $0xe8] sm:$0xff] %v974
        %1007 = vst [vmem:[%s193 + $0xf0] sm:$0xff] %v975
        %1008 = vst [vmem:[%s193 + $0xf8] sm:$0xff] %v976
        %s1009 = sand.u32 %s89, 1
        %s1010 = scalar_lea.sflag [#allocation4], %s1009
        %s1011 = sand.u32 %s89, 1
        %s1012 = smul.addr %s1011, 256
        %s1013 = scalar_lea.vmem [#allocation7], %s1012
        // Predicated region
        $region41: #{tpu_custom_call.1} parent=27 // pred_check
          %p1014 = pneg %p99
        $region42: #{tpu_custom_call.1} parent=27 // pred_check_branch
          %1016 = sbr.rel (%p1014) target = $region44
        $region43: #{tpu_custom_call.1} parent=27 // pred_region
          %s1017 = smul.u32 32, %s24
          %s1019 = ssub.s32 4096, 4096
          %1020 = vsyncadd %s1010, %s1019
          %s1021 = smul.addr %s1017, 128
          %s1022 = scalar_lea.hbm %s2, %s1021
          %s1023 = sshll.u32 %s1013, 4
          %s1024 = int_to_ptr.vmem [resolvable:$true] %s1023
          %1029 = dma.vmem_to_hbm [thread:$0]  %s1024, 4096, %s1022, %s1010, 128, 128, 8
        $region44: #{tpu_custom_call.1} parent=27 // pred_fallthru
          _
      $region28: #{tpu_custom_call.1} parent=5 // pred_fallthru
        _
      %p1030 = scmp.le.s32.totalorder 2, %s15
      // Predicated region
      $region45: #{tpu_custom_call.1} parent=5 // pred_check
        %p1031 = pneg %p1030
      $region46: #{tpu_custom_call.1} parent=5 // pred_check_branch
        %1033 = sbr.rel (%p1031) target = $region48
      $region47: #{tpu_custom_call.1} parent=5 // pred_region
        %s1034 = ssub.s32 %s15, 2
        // Predicated region
        $region49: #{tpu_custom_call.1} parent=47 // pred_check
          %p1035 = pneg %p105
        $region50: #{tpu_custom_call.1} parent=47 // pred_check_branch
          %1037 = sbr.rel (%p1035) target = $region52
        $region51: #{tpu_custom_call.1} parent=47 // pred_region
          %s1038 = sand.u32 %s90, 1
          %s1039 = scalar_lea.sflag [#allocation4], %s1038
          %s1040 = sand.u32 %s90, 1
          %s1041 = smul.addr %s1040, 256
          %s1042 = scalar_lea.vmem [#allocation7], %s1041
          %1043 = dma.done %s1039, 4096
        $region52: #{tpu_custom_call.1} parent=47 // pred_fallthru
          _
      $region48: #{tpu_custom_call.1} parent=5 // pred_fallthru
        _
    $region6: #{tpu_custom_call.1} parent=1 // loop_footer
      %s19 = sadd.s32 1, %s15
    $region7: #{tpu_custom_call.1} parent=1 // loop_footer_branch
      %14 = sbr.rel target = $region3
    $region8: #{tpu_custom_call.1} parent=1 // loop_exit
      _
    %1044 = vsyncpa [#allocation3], 1
    %s1045 = scalar_lea.sflag [#allocation3], 1
    %1046 = vsyncpa %s1045, 1
    %1047 = vsyncpa [#allocation6], 1
    %1048 = vsyncpa [#allocation4], 1
    %s1049 = scalar_lea.sflag [#allocation4], 1
    %1050 = vsyncpa %s1049, 1

</llo_original>
